<compile_context>
chip_gen: v7x
topology: tpu7x:2x2x1
jax: 0.10.0
libtpu: 0.0.40
codegen_flags: <defaults>
</compile_context>

<pallas_src>
import functools

import jax
import jax.numpy as jnp
import numpy as np
from jax.experimental import pallas as pl
from jax.experimental.pallas import tpu as pltpu

LANE = 128


def softplus_inverse(x: float) -> float:
    # y such that softplus(y) = x  ->  y = log(exp(x) - 1)
    return float(np.log(np.expm1(x)))


def _round_up(x: int, m: int) -> int:
    return ((x + m - 1) // m) * m


def _cdiv(a: int, b: int) -> int:
    return -(-a // b)


# ----------------------------------------------------------------------------
# Kernels
# ----------------------------------------------------------------------------

def _rbf_dense_kernel(rc_ref, sel_ref, ctr_ref, out_ref, *,
                      width: float, exp_weighting: bool):
    """Lane-dense path (K divides 128), G = 128 // K distances per output row.

    rc_ref:  VMEM (TM, 2G)   -> [:, :G] = r rows, [:, G:] = cutoff rows
    sel_ref: VMEM (2G, 256)  -> cols   0..127: (-alpha) expansion of r
                                 cols 128..255: 1.0 expansion of cutoff
    ctr_ref: VMEM (1, 128)   -> centers tiled G times along lanes
    out_ref: VMEM (TM, 128)  -> lane-dense view of (TM*G, K) output rows
    """
    # One fused MXU expansion: exact pass-through / scaling of r and cutoff.
    w = jnp.dot(rc_ref[...], sel_ref[...],
                preferred_element_type=jnp.float32,
                precision=jax.lax.Precision.HIGHEST)          # (TM, 256)
    ea = jnp.exp(w[:, :LANE])       # exp(-alpha * r), lane-expanded
    cut = w[:, LANE:]               # cutoff, lane-expanded (bit-exact)
    diff = ea - ctr_ref[...]
    rbf = cut * jnp.exp(-width * diff * diff)
    if exp_weighting:
        rbf = rbf * ea
    out_ref[...] = rbf.astype(out_ref.dtype)


def _rbf_simple_kernel(rc_ref, ctr_ref, out_ref, *,
                       alpha: float, width: float, exp_weighting: bool):
    """Fallback path (K does not divide 128): natural (TN, K) layout.

    rc_ref:  VMEM (TN, 2)  -> column 0 = r, column 1 = cutoff
    ctr_ref: VMEM (1, K)
    out_ref: VMEM (TN, K)
    """
    rc = rc_ref[...]
    ea = jnp.exp(-alpha * rc[:, 0:1])      # (TN, 1)
    cut = rc[:, 1:2]                       # (TN, 1)
    diff = ea - ctr_ref[...]               # (TN, K) via broadcast
    rbf = cut * jnp.exp(-width * diff * diff)
    if exp_weighting:
        rbf = rbf * ea
    out_ref[...] = rbf.astype(out_ref.dtype)


# ----------------------------------------------------------------------------
# Module wrapper
# ----------------------------------------------------------------------------

class ExponentialGaussianFunctionsPallas:
    ROW_TILE_TARGET = 8192        # lane-dense rows / block -> 4 MiB f32 output blocks
    SINGLE_STEP_ROWS = 2048       # below this, keep a single grid step
    FALLBACK_VMEM_TARGET = 8 << 20
    VMEM_HEADROOM = 8 << 20

    def __init__(self,
                 num_basis_functions: int,
                 no_basis_function_at_infinity: bool = False,
                 ini_alpha: float = 0.944863062918464,
                 exp_weighting: bool = False,
                 out_dtype=jnp.float32):
        K = num_basis_functions
        if no_basis_function_at_infinity:
            center = np.linspace(1.0, 0.0, K + 1, dtype=np.float64)[:-1]
            width = float(K + 1)
        else:
            center = np.linspace(1.0, 0.0, K, dtype=np.float64)
            width = float(K)

        self.num_basis_functions = K
        self.exp_weighting = exp_weighting
        self.width = width
        self.out_dtype = out_dtype
        # parameter _alpha initialized so that softplus(_alpha) == ini_alpha
        self._alpha = softplus_inverse(ini_alpha)
        self.alpha = float(np.log1p(np.exp(self._alpha)))        # softplus(_alpha)
        self.center = jnp.asarray(center, dtype=jnp.float32).reshape(1, K)

        # Lane-dense layout available iff K evenly divides the 128-lane width.
        self._lane_dense = (K <= LANE) and (LANE % K == 0)
        if self._lane_dense:
            G = LANE // K
            self._G = G
            c32 = np.asarray(center, dtype=np.float32)
            sel = np.zeros((2 * G, 2 * LANE), dtype=np.float32)
            for g in range(G):
                sel[g, g * K:(g + 1) * K] = -self.alpha              # r -> -alpha*r
                sel[G + g, LANE + g * K: LANE + (g + 1) * K] = 1.0   # cutoff pass-thru
            self._sel = jnp.asarray(sel)                             # (2G, 256)
            self._center_tiled = jnp.asarray(np.tile(c32, G)).reshape(1, LANE)

    # -- public API -----------------------------------------------------------

    def __call__(self, r: jax.Array, cutoff_values: jax.Array) -> jax.Array:
        N = int(r.shape[0])
        r32 = jnp.asarray(r).reshape(-1).astype(jnp.float32)
        c32 = jnp.asarray(cutoff_values).reshape(-1).astype(jnp.float32)
        if self._lane_dense:
            return self._call_lane_dense(r32, c32, N)
        return self._call_simple(r32, c32, N)

    # -- lane-dense path (128 % K == 0) ---------------------------------------

    def _call_lane_dense(self, r32, c32, N):
        K = self.num_basis_functions
        G = self._G
        M = _cdiv(N, G)                        # output rows in the (M, 128) view
        M8 = _round_up(max(M, 1), 8)           # tiny sublane alignment pad only

        # Big tiles to amortize per-step grid overhead; >=2 balanced steps for
        # medium/large inputs (v7x two TensorCores); single step for small ones.
        half = _round_up(_cdiv(M8, 2), 8)
        TM = min(self.ROW_TILE_TARGET, M8, max(self.SINGLE_STEP_ROWS, half))
        grid = (_cdiv(M8, TM),)

        n_pad = M8 * G
        r_p = jnp.pad(r32, (0, n_pad - N))
        c_p = jnp.pad(c32, (0, n_pad - N))
        # Pack r and cutoff into a single (M8, 2G) stream: one DMA per step.
        rc = jnp.concatenate([r_p.reshape(M8, G), c_p.reshape(M8, G)], axis=1)

        # Real double-buffered VMEM footprint: both blocks lane-pad to 128.
        rc_row_bytes = _round_up(2 * G, LANE) * 4
        out_row_bytes = LANE * 4
        vmem_bytes = 2 * TM * (rc_row_bytes + out_row_bytes) + self.VMEM_HEADROOM

        kernel = functools.partial(_rbf_dense_kernel,
                                   width=self.width,
                                   exp_weighting=self.exp_weighting)

        out = pl.pallas_call(
            kernel,
            out_shape=jax.ShapeDtypeStruct((M8, LANE), self.out_dtype),
            grid=grid,
            in_specs=[
                pl.BlockSpec((TM, 2 * G), lambda i: (i, 0)),        # rc
                pl.BlockSpec((2 * G, 2 * LANE), lambda i: (0, 0)),  # selection
                pl.BlockSpec((1, LANE), lambda i: (0, 0)),          # centers
            ],
            out_specs=pl.BlockSpec((TM, LANE), lambda i: (i, 0)),
            compiler_params=pltpu.CompilerParams(
                dimension_semantics=("parallel",),
                vmem_limit_bytes=int(vmem_bytes)),
        )(rc, self._sel, self._center_tiled)

        # (M8, 128) row-major is bit-identical to (M8*G, K): free reshape.
        out = out.reshape(M8 * G, K)
        if M8 * G == N:
            return out          # no trim copy at all
        # Only when N is not 8*G-aligned does a (small) slice copy remain.
        return out[:N]

    # -- fallback path (K does not divide 128) --------------------------------

    def _call_simple(self, r32, c32, N):
        # TODO(synk): route K values that do not divide 128 through the
        # lane-dense path by padding centers to the next divisor of 128
        # (trades ~1.6x padded write bytes for full-width unmasked stores).
        K = self.num_basis_functions
        N8 = _round_up(max(N, 1), 8)

        # Both the (TN, K) output block and the (TN, 2) rc block lane-pad to
        # 128 lanes in VMEM: size TN with the padded per-row cost.
        out_row_bytes = _round_up(K, LANE) * 4
        rc_row_bytes = LANE * 4
        per_row_db = 2 * (out_row_bytes + rc_row_bytes)      # double-buffered
        tn_cap = max(8, (self.FALLBACK_VMEM_TARGET // per_row_db) // 8 * 8)
        TN = min(tn_cap, N8)
        grid = (_cdiv(N8, TN),)

        r_p = jnp.pad(r32, (0, N8 - N)).reshape(N8, 1)
        c_p = jnp.pad(c32, (0, N8 - N)).reshape(N8, 1)
        rc = jnp.concatenate([r_p, c_p], axis=1)             # (N8, 2)

        vmem_bytes = TN * per_row_db + self.VMEM_HEADROOM

        kernel = functools.partial(_rbf_simple_kernel,
                                   alpha=self.alpha, width=self.width,
                                   exp_weighting=self.exp_weighting)

        out = pl.pallas_call(
            kernel,
            out_shape=jax.ShapeDtypeStruct((N8, K), self.out_dtype),
            grid=grid,
            in_specs=[
                pl.BlockSpec((TN, 2), lambda i: (i, 0)),     # rc
                pl.BlockSpec((1, K), lambda i: (0, 0)),      # centers
            ],
            out_specs=pl.BlockSpec((TN, K), lambda i: (i, 0)),
            compiler_params=pltpu.CompilerParams(
                dimension_semantics=("parallel",),
                vmem_limit_bytes=int(vmem_bytes)),
        )(rc, self.center)

        if N8 == N:
            return out
        return out[:N]


# ----------------------------------------------------------------------------
# Reference & self-test
# ----------------------------------------------------------------------------

def _reference(module: ExponentialGaussianFunctionsPallas, r, cutoff_values):
    ea = jnp.exp(-module.alpha * r.reshape(-1, 1).astype(jnp.float32))
    rbf = cutoff_values.reshape(-1, 1).astype(jnp.float32) * jnp.exp(
        -module.width * (ea - module.center) ** 2)
    if module.exp_weighting:
        rbf = rbf * ea
    return rbf


if __name__ == "__main__":
    key = jax.random.PRNGKey(0)
    k1, k2 = jax.random.split(key)

    cases = [
        dict(N=50, K=32, no_inf=False, exp_w=False),  # lane-dense, trimmed tail
        dict(N=64, K=32, no_inf=True,  exp_w=True),   # lane-dense, aligned (no trim)
        dict(N=48, K=64, no_inf=False, exp_w=True),   # lane-dense, G=2, aligned
        dict(N=30, K=20, no_inf=False, exp_w=True),   # fallback (128 % 20 != 0)
    ]

    ok = True
    for c in cases:
        N, K = c["N"], c["K"]
        r = jax.random.uniform(k1, (N,), dtype=jnp.float32, minval=0.0, maxval=5.0)
        cutoff_values = jax.random.uniform(k2, (N,), dtype=jnp.float32,
                                           minval=0.0, maxval=1.0)
        mod = ExponentialGaussianFunctionsPallas(
            num_basis_functions=K,
            no_basis_function_at_infinity=c["no_inf"],
            exp_weighting=c["exp_w"],
        )
        out = mod(r, cutoff_values)
        jax.block_until_ready(out)
        ref = _reference(mod, r, cutoff_values)

        ok = ok and (out.shape == (N, K)) and (out.dtype == jnp.float32)
        ok = ok and bool(jnp.allclose(out, ref, atol=2e-5, rtol=1e-4))

    if ok:
        print("KERNEL_OK")
</pallas_src>

<mosaic_0001>
module attributes {stable_mosaic.version = 11 : i64} {
  func.func @_rbf_dense_kernel(%arg0: i32, %arg1: memref<16x8xf32, #tpu.memory_space<vmem>>, %arg2: memref<8x256xf32, #tpu.memory_space<vmem>>, %arg3: memref<1x128xf32, #tpu.memory_space<vmem>>, %arg4: memref<16x128xf32, #tpu.memory_space<vmem>>) attributes {dimension_semantics = [#tpu.dimension_semantics<parallel>], iteration_bounds = array<i64: 1>, scalar_prefetch = 0 : i64, scratch_operands = 0 : i64, tpu.core_type = #tpu.core_type<tc>, window_params = [{transform_indices = @transform_0, window_bounds = array<i64: 16, 8>}, {pipeline_mode = #tpu.pipeline_mode<synchronous>, transform_indices = @transform_1, window_bounds = array<i64: 8, 256>}, {pipeline_mode = #tpu.pipeline_mode<synchronous>, transform_indices = @transform_2, window_bounds = array<i64: 1, 128>}, {transform_indices = @transform_3, window_bounds = array<i64: 16, 128>}]} {
    %c0 = arith.constant 0 : index
    %c0_0 = arith.constant 0 : index
    %0 = vector.load %arg1[%c0, %c0_0] : memref<16x8xf32, #tpu.memory_space<vmem>>, vector<16x8xf32>
    %c0_1 = arith.constant 0 : index
    %c0_2 = arith.constant 0 : index
    %1 = vector.load %arg2[%c0_1, %c0_2] : memref<8x256xf32, #tpu.memory_space<vmem>>, vector<8x256xf32>
    %cst = arith.constant dense<0.000000e+00> : vector<16x256xf32>
    %2 = tpu.matmul %0, %1, %cst {dimension_numbers = #tpu.dot_dimension_numbers<[1], [0], [0], [1], [0, 0, 1, 1], [], []>, precision = #tpu.contract_precision<fp32>} : vector<16x8xf32>, vector<8x256xf32>, vector<16x256xf32> -> vector<16x256xf32>
    %3 = vector.extract_strided_slice %2 {offsets = [0, 0], sizes = [16, 128], strides = [1, 1]} : vector<16x256xf32> to vector<16x128xf32>
    %4 = math.exp %3 : vector<16x128xf32>
    %5 = vector.extract_strided_slice %2 {offsets = [0, 128], sizes = [16, 128], strides = [1, 1]} : vector<16x256xf32> to vector<16x128xf32>
    %c0_3 = arith.constant 0 : index
    %c0_4 = arith.constant 0 : index
    %6 = vector.load %arg3[%c0_3, %c0_4] : memref<1x128xf32, #tpu.memory_space<vmem>>, vector<1x128xf32>
    %7 = vector.broadcast %6 : vector<1x128xf32> to vector<16x128xf32>
    %8 = arith.subf %4, %7 : vector<16x128xf32>
    %cst_5 = arith.constant -3.200000e+01 : f32
    %9 = vector.broadcast %cst_5 : f32 to vector<16x128xf32>
    %10 = arith.mulf %9, %8 : vector<16x128xf32>
    %11 = arith.mulf %10, %8 : vector<16x128xf32>
    %12 = math.exp %11 : vector<16x128xf32>
    %13 = arith.mulf %5, %12 : vector<16x128xf32>
    %c0_6 = arith.constant 0 : index
    %c0_7 = arith.constant 0 : index
    %14 = vector.load %arg4[%c0_6, %c0_7] : memref<16x128xf32, #tpu.memory_space<vmem>>, vector<16x128xf32>
    tpu.vector_store %arg4[%c0_6, %c0_7], %13 {strides = array<i32>} : memref<16x128xf32, #tpu.memory_space<vmem>>, vector<16x128xf32>,
    return
  }
  func.func @transform_0(%arg0: i32) -> (i32, i32) {
    %c0_i32 = arith.constant 0 : i32
    %c0_i32_0 = arith.constant 0 : i32
    return %arg0, %c0_i32 : i32, i32
  }
  func.func @transform_1(%arg0: i32) -> (i32, i32) {
    %c0_i32 = arith.constant 0 : i32
    %c0_i32_0 = arith.constant 0 : i32
    %c0_i32_1 = arith.constant 0 : i32
    return %c0_i32, %c0_i32_0 : i32, i32
  }
  func.func @transform_2(%arg0: i32) -> (i32, i32) {
    %c0_i32 = arith.constant 0 : i32
    %c0_i32_0 = arith.constant 0 : i32
    %c0_i32_1 = arith.constant 0 : i32
    return %c0_i32, %c0_i32_0 : i32, i32
  }
  func.func @transform_3(%arg0: i32) -> (i32, i32) {
    %c0_i32 = arith.constant 0 : i32
    %c0_i32_0 = arith.constant 0 : i32
    return %arg0, %c0_i32 : i32, i32
  }
}

</mosaic_0001>

<llo_original>
// kernel: tpu_custom_call.1
$region0: #{tpu_custom_call.1}
  #allocation0 [shape = 'u32[]', space=smem, size = 0x4, offset = 0x4, fixed_abs, tag = 'smem constant byte address 0x4 - core index']
  #allocation1 [shape = 'u32[144,128]{1,0:T(1,128)}', space=vmem, size = 0x12000, scoped, tag = 'internal scratch']
  %s0 = inlined_call_operand.vmem [shape: f32[16,8], index: 0, kind: input, shape index: {}]
  %s1 = inlined_call_operand.vmem [shape: f32[8,256], index: 1, kind: input, shape index: {}]
  %s2 = inlined_call_operand.vmem [shape: f32[1,128], index: 2, kind: input, shape index: {}]
  %s3 = inlined_call_operand.hbm [shape: f32[16,128], index: 3, kind: output, shape index: {}]
  %s4 = sld [smem:[#allocation0]]
  $region22: #{tpu_custom_call.1} parent=0
    _
  %s6 = ssub.s32 1, %s4
  %s7 = scalar_select 0, %s6, %s4
  $region1: #{tpu_custom_call.1} parent=0
    #allocation2 [shape = 'u8[8192]{0}', space=vmem, size = 0x2000, scoped, tag = 'output window, operand 0, single buffered']
    #allocation3 [shape = 's32[1]{0}', space=sflag, size = 0x4, scoped, tag = 'scoped memory for tpu_custom_call.1']
    %8 = vsyncpa [#allocation3], 0
    // Predicated region
    $region2: #{tpu_custom_call.1} parent=1 // pred_check
      _
    $region3: #{tpu_custom_call.1} parent=1 // pred_check_branch
      %10 = sbr.rel (0) target = $region5
    $region4: #{tpu_custom_call.1} parent=1 // pred_region
      _
    $region5: #{tpu_custom_call.1} parent=1 // pred_fallthru
      _
    // Predicated region
    $region6: #{tpu_custom_call.1} parent=1 // pred_check
      _
    $region7: #{tpu_custom_call.1} parent=1 // pred_check_branch
      %12 = sbr.rel (0) target = $region9
    $region8: #{tpu_custom_call.1} parent=1 // pred_region
      _
    $region9: #{tpu_custom_call.1} parent=1 // pred_fallthru
      _
    // Predicated region
    $region10: #{tpu_custom_call.1} parent=1 // pred_check
      _
    $region11: #{tpu_custom_call.1} parent=1 // pred_check_branch
      %14 = sbr.rel (0) target = $region13
    $region12: #{tpu_custom_call.1} parent=1 // pred_region
      _
    $region13: #{tpu_custom_call.1} parent=1 // pred_fallthru
      _
    %v15 = vld [vmem:[%s0] sm:$0xff]
    %v16 = vld [vmem:[%s0 + $0x8] sm:$0xff]
    %v17 = vld [vmem:[%s1] sm:$0xff]
    %v18 = vld [vmem:[%s1 + $0x8] sm:$0xff]
    %vm19 = vcmask 64512
    %v21 = vsel %vm19, %v15, 0
    %v24 = vsel %vm19, %v16, 0
    %v26 = vand.u32 %v18, 4294901760
    %27 = vmatprep.subr.mxu0 %v26
    %v28 = vand.u32 %v17, 4294901760
    %29 = vmatpush1.msra.mxu0 %v28
    %30 = vmatprep.subr.mxu0 0.0
    %31 = vmatpush1.msra.mxu0 0.0
    %32 = vmatprep.subr.mxu0 0.0
    %33 = vmatpush1.msra.mxu0 0.0
    %34 = vmatprep.subr.mxu0 0.0
    %35 = vmatpush1.msra.mxu0 0.0
    %36 = vmatprep.subr.mxu0 0.0
    %37 = vmatpush1.msra.mxu0 0.0
    %38 = vmatprep.subr.mxu0 0.0
    %39 = vmatpush1.msra.mxu0 0.0
    %40 = vmatprep.subr.mxu0 0.0
    %41 = vmatpush1.msra.mxu0 0.0
    %42 = vmatprep.subr.mxu0 0.0
    %43 = vmatpush1.msra.mxu0 0.0
    %44 = vmatprep.subr.mxu0 0.0
    %45 = vmatpush1.msra.mxu0 0.0
    %46 = vmatprep.subr.mxu0 0.0
    %47 = vmatpush1.msra.mxu0 0.0
    %48 = vmatprep.subr.mxu0 0.0
    %49 = vmatpush1.msra.mxu0 0.0
    %50 = vmatprep.subr.mxu0 0.0
    %51 = vmatpush1.msra.mxu0 0.0
    %52 = vmatprep.subr.mxu0 0.0
    %53 = vmatpush1.msra.mxu0 0.0
    %54 = vmatprep.subr.mxu0 0.0
    %55 = vmatpush1.msra.mxu0 0.0
    %56 = vmatprep.subr.mxu0 0.0
    %57 = vmatpush1.msra.mxu0 0.0
    %58 = vmatprep.subr.mxu0 0.0
    %59 = vmatpush1.msra.mxu0 0.0
    %60 = vmatprep.subr.mxu0 0.0
    %61 = vmatpush1.msra.mxu0 0.0
    %62 = vmatprep.subr.mxu0 0.0
    %63 = vmatpush1.msra.mxu0 0.0
    %64 = vmatprep.subr.mxu0 0.0
    %65 = vmatpush1.msra.mxu0 0.0
    %66 = vmatprep.subr.mxu0 0.0
    %67 = vmatpush1.msra.mxu0 0.0
    %68 = vmatprep.subr.mxu0 0.0
    %69 = vmatpush1.msra.mxu0 0.0
    %70 = vmatprep.subr.mxu0 0.0
    %71 = vmatpush1.msra.mxu0 0.0
    %72 = vmatprep.subr.mxu0 0.0
    %73 = vmatpush1.msra.mxu0 0.0
    %74 = vmatprep.subr.mxu0 0.0
    %75 = vmatpush1.msra.mxu0 0.0
    %76 = vmatprep.subr.mxu0 0.0
    %77 = vmatpush1.msra.mxu0 0.0
    %78 = vmatprep.subr.mxu0 0.0
    %79 = vmatpush1.msra.mxu0 0.0
    %80 = vmatprep.subr.mxu0 0.0
    %81 = vmatpush1.msra.mxu0 0.0
    %82 = vmatprep.subr.mxu0 0.0
    %83 = vmatpush1.msra.mxu0 0.0
    %84 = vmatprep.subr.mxu0 0.0
    %85 = vmatpush1.msra.mxu0 0.0
    %86 = vmatprep.subr.mxu0 0.0
    %87 = vmatpush1.msra.mxu0 0.0
    %88 = vmatprep.subr.mxu0 0.0
    %89 = vmatpush1.msra.mxu0 0.0
    %90 = vmatprep.subr.mxu0 0.0
    %91 = vmatpush1.msra.mxu0 0.0
    %92 = vmatprep.mubr.f32.mxu0 0.0
    %v93 = vand.u32 %v21, 4294901760
    %v94 = vsub.f32 %v21, %v93
    %v95 = vand.u32 %v94, 4294901760
    %v96 = vsub.f32 %v94, %v95
    %v97 = vand.u32 %v96, 4294901760
    %98 = vmatmul.mubr.f32.gmra.mrb[0].mxu0 %v97
    %v99 = vpop.f32.mrb[0].mxu0
    %v100 = vadd.f32 0.0, %v99
    %v101 = vpop.f32.mrb[0].mxu0
    %v102 = vadd.f32 0.0, %v101
    %103 = vmatprep.mubr.f32.mxu0 0.0
    %v104 = vand.u32 %v24, 4294901760
    %v105 = vsub.f32 %v24, %v104
    %v106 = vand.u32 %v105, 4294901760
    %v107 = vsub.f32 %v105, %v106
    %v108 = vand.u32 %v107, 4294901760
    %109 = vmatmul.mubr.f32.gmra.mrb[0].mxu0 %v108
    %v110 = vpop.f32.mrb[0].mxu0
    %v111 = vadd.f32 0.0, %v110
    %v112 = vpop.f32.mrb[0].mxu0
    %v113 = vadd.f32 0.0, %v112
    %114 = vdwg.mxu0
    %v115 = vand.u32 %v18, 4294901760
    %v116 = vsub.f32 %v18, %v115
    %v117 = vand.u32 %v116, 4294901760
    %v118 = vsub.f32 %v116, %v117
    %v119 = vand.u32 %v118, 4294901760
    %120 = vmatprep.subr.mxu0 %v119
    %v121 = vand.u32 %v17, 4294901760
    %v122 = vsub.f32 %v17, %v121
    %v123 = vand.u32 %v122, 4294901760
    %v124 = vsub.f32 %v122, %v123
    %v125 = vand.u32 %v124, 4294901760
    %126 = vmatpush1.msra.mxu0 %v125
    %127 = vmatprep.subr.mxu0 0.0
    %128 = vmatpush1.msra.mxu0 0.0
    %129 = vmatprep.subr.mxu0 0.0
    %130 = vmatpush1.msra.mxu0 0.0
    %131 = vmatprep.subr.mxu0 0.0
    %132 = vmatpush1.msra.mxu0 0.0
    %133 = vmatprep.subr.mxu0 0.0
    %134 = vmatpush1.msra.mxu0 0.0
    %135 = vmatprep.subr.mxu0 0.0
    %136 = vmatpush1.msra.mxu0 0.0
    %137 = vmatprep.subr.mxu0 0.0
    %138 = vmatpush1.msra.mxu0 0.0
    %139 = vmatprep.subr.mxu0 0.0
    %140 = vmatpush1.msra.mxu0 0.0
    %141 = vmatprep.subr.mxu0 0.0
    %142 = vmatpush1.msra.mxu0 0.0
    %143 = vmatprep.subr.mxu0 0.0
    %144 = vmatpush1.msra.mxu0 0.0
    %145 = vmatprep.subr.mxu0 0.0
    %146 = vmatpush1.msra.mxu0 0.0
    %147 = vmatprep.subr.mxu0 0.0
    %148 = vmatpush1.msra.mxu0 0.0
    %149 = vmatprep.subr.mxu0 0.0
    %150 = vmatpush1.msra.mxu0 0.0
    %151 = vmatprep.subr.mxu0 0.0
    %152 = vmatpush1.msra.mxu0 0.0
    %153 = vmatprep.subr.mxu0 0.0
    %154 = vmatpush1.msra.mxu0 0.0
    %155 = vmatprep.subr.mxu0 0.0
    %156 = vmatpush1.msra.mxu0 0.0
    %157 = vmatprep.subr.mxu0 0.0
    %158 = vmatpush1.msra.mxu0 0.0
    %159 = vmatprep.subr.mxu0 0.0
    %160 = vmatpush1.msra.mxu0 0.0
    %161 = vmatprep.subr.mxu0 0.0
    %162 = vmatpush1.msra.mxu0 0.0
    %163 = vmatprep.subr.mxu0 0.0
    %164 = vmatpush1.msra.mxu0 0.0
    %165 = vmatprep.subr.mxu0 0.0
    %166 = vmatpush1.msra.mxu0 0.0
    %167 = vmatprep.subr.mxu0 0.0
    %168 = vmatpush1.msra.mxu0 0.0
    %169 = vmatprep.subr.mxu0 0.0
    %170 = vmatpush1.msra.mxu0 0.0
    %171 = vmatprep.subr.mxu0 0.0
    %172 = vmatpush1.msra.mxu0 0.0
    %173 = vmatprep.subr.mxu0 0.0
    %174 = vmatpush1.msra.mxu0 0.0
    %175 = vmatprep.subr.mxu0 0.0
    %176 = vmatpush1.msra.mxu0 0.0
    %177 = vmatprep.subr.mxu0 0.0
    %178 = vmatpush1.msra.mxu0 0.0
    %179 = vmatprep.subr.mxu0 0.0
    %180 = vmatpush1.msra.mxu0 0.0
    %181 = vmatprep.subr.mxu0 0.0
    %182 = vmatpush1.msra.mxu0 0.0
    %183 = vmatprep.subr.mxu0 0.0
    %184 = vmatpush1.msra.mxu0 0.0
    %185 = vmatprep.subr.mxu0 0.0
    %186 = vmatpush1.msra.mxu0 0.0
    %187 = vmatprep.subr.mxu0 0.0
    %188 = vmatpush1.msra.mxu0 0.0
    %189 = vmatprep.mubr.f32.mxu0 0.0
    %v190 = vand.u32 %v21, 4294901760
    %191 = vmatmul.mubr.f32.gmra.mrb[0].mxu0 %v190
    %v192 = vpop.f32.mrb[0].mxu0
    %v193 = vadd.f32 %v100, %v192
    %v194 = vpop.f32.mrb[0].mxu0
    %v195 = vadd.f32 %v102, %v194
    %196 = vmatprep.mubr.f32.mxu0 0.0
    %v197 = vand.u32 %v24, 4294901760
    %198 = vmatmul.mubr.f32.gmra.mrb[0].mxu0 %v197
    %v199 = vpop.f32.mrb[0].mxu0
    %v200 = vadd.f32 %v111, %v199
    %v201 = vpop.f32.mrb[0].mxu0
    %v202 = vadd.f32 %v113, %v201
    %203 = vdwg.mxu0
    %v204 = vand.u32 %v18, 4294901760
    %v205 = vsub.f32 %v18, %v204
    %206 = vmatprep.subr.mxu0 %v205
    %v207 = vand.u32 %v17, 4294901760
    %v208 = vsub.f32 %v17, %v207
    %209 = vmatpush1.msra.mxu0 %v208
    %210 = vmatprep.subr.mxu0 0.0
    %211 = vmatpush1.msra.mxu0 0.0
    %212 = vmatprep.subr.mxu0 0.0
    %213 = vmatpush1.msra.mxu0 0.0
    %214 = vmatprep.subr.mxu0 0.0
    %215 = vmatpush1.msra.mxu0 0.0
    %216 = vmatprep.subr.mxu0 0.0
    %217 = vmatpush1.msra.mxu0 0.0
    %218 = vmatprep.subr.mxu0 0.0
    %219 = vmatpush1.msra.mxu0 0.0
    %220 = vmatprep.subr.mxu0 0.0
    %221 = vmatpush1.msra.mxu0 0.0
    %222 = vmatprep.subr.mxu0 0.0
    %223 = vmatpush1.msra.mxu0 0.0
    %224 = vmatprep.subr.mxu0 0.0
    %225 = vmatpush1.msra.mxu0 0.0
    %226 = vmatprep.subr.mxu0 0.0
    %227 = vmatpush1.msra.mxu0 0.0
    %228 = vmatprep.subr.mxu0 0.0
    %229 = vmatpush1.msra.mxu0 0.0
    %230 = vmatprep.subr.mxu0 0.0
    %231 = vmatpush1.msra.mxu0 0.0
    %232 = vmatprep.subr.mxu0 0.0
    %233 = vmatpush1.msra.mxu0 0.0
    %234 = vmatprep.subr.mxu0 0.0
    %235 = vmatpush1.msra.mxu0 0.0
    %236 = vmatprep.subr.mxu0 0.0
    %237 = vmatpush1.msra.mxu0 0.0
    %238 = vmatprep.subr.mxu0 0.0
    %239 = vmatpush1.msra.mxu0 0.0
    %240 = vmatprep.subr.mxu0 0.0
    %241 = vmatpush1.msra.mxu0 0.0
    %242 = vmatprep.subr.mxu0 0.0
    %243 = vmatpush1.msra.mxu0 0.0
    %244 = vmatprep.subr.mxu0 0.0
    %245 = vmatpush1.msra.mxu0 0.0
    %246 = vmatprep.subr.mxu0 0.0
    %247 = vmatpush1.msra.mxu0 0.0
    %248 = vmatprep.subr.mxu0 0.0
    %249 = vmatpush1.msra.mxu0 0.0
    %250 = vmatprep.subr.mxu0 0.0
    %251 = vmatpush1.msra.mxu0 0.0
    %252 = vmatprep.subr.mxu0 0.0
    %253 = vmatpush1.msra.mxu0 0.0
    %254 = vmatprep.subr.mxu0 0.0
    %255 = vmatpush1.msra.mxu0 0.0
    %256 = vmatprep.subr.mxu0 0.0
    %257 = vmatpush1.msra.mxu0 0.0
    %258 = vmatprep.subr.mxu0 0.0
    %259 = vmatpush1.msra.mxu0 0.0
    %260 = vmatprep.subr.mxu0 0.0
    %261 = vmatpush1.msra.mxu0 0.0
    %262 = vmatprep.subr.mxu0 0.0
    %263 = vmatpush1.msra.mxu0 0.0
    %264 = vmatprep.subr.mxu0 0.0
    %265 = vmatpush1.msra.mxu0 0.0
    %266 = vmatprep.subr.mxu0 0.0
    %267 = vmatpush1.msra.mxu0 0.0
    %268 = vmatprep.subr.mxu0 0.0
    %269 = vmatpush1.msra.mxu0 0.0
    %270 = vmatprep.subr.mxu0 0.0
    %271 = vmatpush1.msra.mxu0 0.0
    %272 = vmatprep.mubr.f32.mxu0 0.0
    %v273 = vand.u32 %v21, 4294901760
    %v274 = vsub.f32 %v21, %v273
    %275 = vmatmul.mubr.f32.gmra.mrb[0].mxu0 %v274
    %v276 = vpop.f32.mrb[0].mxu0
    %v277 = vadd.f32 %v193, %v276
    %v278 = vpop.f32.mrb[0].mxu0
    %v279 = vadd.f32 %v195, %v278
    %280 = vmatprep.mubr.f32.mxu0 0.0
    %v281 = vand.u32 %v24, 4294901760
    %v282 = vsub.f32 %v24, %v281
    %283 = vmatmul.mubr.f32.gmra.mrb[0].mxu0 %v282
    %v284 = vpop.f32.mrb[0].mxu0
    %v285 = vadd.f32 %v200, %v284
    %v286 = vpop.f32.mrb[0].mxu0
    %v287 = vadd.f32 %v202, %v286
    %288 = vdwg.mxu0
    %v289 = vand.u32 %v18, 4294901760
    %290 = vmatprep.subr.mxu0 %v289
    %v291 = vand.u32 %v17, 4294901760
    %292 = vmatpush1.msra.mxu0 %v291
    %293 = vmatprep.subr.mxu0 0.0
    %294 = vmatpush1.msra.mxu0 0.0
    %295 = vmatprep.subr.mxu0 0.0
    %296 = vmatpush1.msra.mxu0 0.0
    %297 = vmatprep.subr.mxu0 0.0
    %298 = vmatpush1.msra.mxu0 0.0
    %299 = vmatprep.subr.mxu0 0.0
    %300 = vmatpush1.msra.mxu0 0.0
    %301 = vmatprep.subr.mxu0 0.0
    %302 = vmatpush1.msra.mxu0 0.0
    %303 = vmatprep.subr.mxu0 0.0
    %304 = vmatpush1.msra.mxu0 0.0
    %305 = vmatprep.subr.mxu0 0.0
    %306 = vmatpush1.msra.mxu0 0.0
    %307 = vmatprep.subr.mxu0 0.0
    %308 = vmatpush1.msra.mxu0 0.0
    %309 = vmatprep.subr.mxu0 0.0
    %310 = vmatpush1.msra.mxu0 0.0
    %311 = vmatprep.subr.mxu0 0.0
    %312 = vmatpush1.msra.mxu0 0.0
    %313 = vmatprep.subr.mxu0 0.0
    %314 = vmatpush1.msra.mxu0 0.0
    %315 = vmatprep.subr.mxu0 0.0
    %316 = vmatpush1.msra.mxu0 0.0
    %317 = vmatprep.subr.mxu0 0.0
    %318 = vmatpush1.msra.mxu0 0.0
    %319 = vmatprep.subr.mxu0 0.0
    %320 = vmatpush1.msra.mxu0 0.0
    %321 = vmatprep.subr.mxu0 0.0
    %322 = vmatpush1.msra.mxu0 0.0
    %323 = vmatprep.subr.mxu0 0.0
    %324 = vmatpush1.msra.mxu0 0.0
    %325 = vmatprep.subr.mxu0 0.0
    %326 = vmatpush1.msra.mxu0 0.0
    %327 = vmatprep.subr.mxu0 0.0
    %328 = vmatpush1.msra.mxu0 0.0
    %329 = vmatprep.subr.mxu0 0.0
    %330 = vmatpush1.msra.mxu0 0.0
    %331 = vmatprep.subr.mxu0 0.0
    %332 = vmatpush1.msra.mxu0 0.0
    %333 = vmatprep.subr.mxu0 0.0
    %334 = vmatpush1.msra.mxu0 0.0
    %335 = vmatprep.subr.mxu0 0.0
    %336 = vmatpush1.msra.mxu0 0.0
    %337 = vmatprep.subr.mxu0 0.0
    %338 = vmatpush1.msra.mxu0 0.0
    %339 = vmatprep.subr.mxu0 0.0
    %340 = vmatpush1.msra.mxu0 0.0
    %341 = vmatprep.subr.mxu0 0.0
    %342 = vmatpush1.msra.mxu0 0.0
    %343 = vmatprep.subr.mxu0 0.0
    %344 = vmatpush1.msra.mxu0 0.0
    %345 = vmatprep.subr.mxu0 0.0
    %346 = vmatpush1.msra.mxu0 0.0
    %347 = vmatprep.subr.mxu0 0.0
    %348 = vmatpush1.msra.mxu0 0.0
    %349 = vmatprep.subr.mxu0 0.0
    %350 = vmatpush1.msra.mxu0 0.0
    %351 = vmatprep.subr.mxu0 0.0
    %352 = vmatpush1.msra.mxu0 0.0
    %353 = vmatprep.subr.mxu0 0.0
    %354 = vmatpush1.msra.mxu0 0.0
    %355 = vmatprep.mubr.f32.mxu0 0.0
    %v356 = vand.u32 %v21, 4294901760
    %v357 = vsub.f32 %v21, %v356
    %v358 = vand.u32 %v357, 4294901760
    %359 = vmatmul.mubr.f32.gmra.mrb[0].mxu0 %v358
    %v360 = vpop.f32.mrb[0].mxu0
    %v361 = vadd.f32 %v277, %v360
    %v362 = vpop.f32.mrb[0].mxu0
    %v363 = vadd.f32 %v279, %v362
    %364 = vmatprep.mubr.f32.mxu0 0.0
    %v365 = vand.u32 %v24, 4294901760
    %v366 = vsub.f32 %v24, %v365
    %v367 = vand.u32 %v366, 4294901760
    %368 = vmatmul.mubr.f32.gmra.mrb[0].mxu0 %v367
    %v369 = vpop.f32.mrb[0].mxu0
    %v370 = vadd.f32 %v285, %v369
    %v371 = vpop.f32.mrb[0].mxu0
    %v372 = vadd.f32 %v287, %v371
    %373 = vdwg.mxu0
    %v374 = vand.u32 %v18, 4294901760
    %v375 = vsub.f32 %v18, %v374
    %v376 = vand.u32 %v375, 4294901760
    %377 = vmatprep.subr.mxu0 %v376
    %v378 = vand.u32 %v17, 4294901760
    %v379 = vsub.f32 %v17, %v378
    %v380 = vand.u32 %v379, 4294901760
    %381 = vmatpush1.msra.mxu0 %v380
    %382 = vmatprep.subr.mxu0 0.0
    %383 = vmatpush1.msra.mxu0 0.0
    %384 = vmatprep.subr.mxu0 0.0
    %385 = vmatpush1.msra.mxu0 0.0
    %386 = vmatprep.subr.mxu0 0.0
    %387 = vmatpush1.msra.mxu0 0.0
    %388 = vmatprep.subr.mxu0 0.0
    %389 = vmatpush1.msra.mxu0 0.0
    %390 = vmatprep.subr.mxu0 0.0
    %391 = vmatpush1.msra.mxu0 0.0
    %392 = vmatprep.subr.mxu0 0.0
    %393 = vmatpush1.msra.mxu0 0.0
    %394 = vmatprep.subr.mxu0 0.0
    %395 = vmatpush1.msra.mxu0 0.0
    %396 = vmatprep.subr.mxu0 0.0
    %397 = vmatpush1.msra.mxu0 0.0
    %398 = vmatprep.subr.mxu0 0.0
    %399 = vmatpush1.msra.mxu0 0.0
    %400 = vmatprep.subr.mxu0 0.0
    %401 = vmatpush1.msra.mxu0 0.0
    %402 = vmatprep.subr.mxu0 0.0
    %403 = vmatpush1.msra.mxu0 0.0
    %404 = vmatprep.subr.mxu0 0.0
    %405 = vmatpush1.msra.mxu0 0.0
    %406 = vmatprep.subr.mxu0 0.0
    %407 = vmatpush1.msra.mxu0 0.0
    %408 = vmatprep.subr.mxu0 0.0
    %409 = vmatpush1.msra.mxu0 0.0
    %410 = vmatprep.subr.mxu0 0.0
    %411 = vmatpush1.msra.mxu0 0.0
    %412 = vmatprep.subr.mxu0 0.0
    %413 = vmatpush1.msra.mxu0 0.0
    %414 = vmatprep.subr.mxu0 0.0
    %415 = vmatpush1.msra.mxu0 0.0
    %416 = vmatprep.subr.mxu0 0.0
    %417 = vmatpush1.msra.mxu0 0.0
    %418 = vmatprep.subr.mxu0 0.0
    %419 = vmatpush1.msra.mxu0 0.0
    %420 = vmatprep.subr.mxu0 0.0
    %421 = vmatpush1.msra.mxu0 0.0
    %422 = vmatprep.subr.mxu0 0.0
    %423 = vmatpush1.msra.mxu0 0.0
    %424 = vmatprep.subr.mxu0 0.0
    %425 = vmatpush1.msra.mxu0 0.0
    %426 = vmatprep.subr.mxu0 0.0
    %427 = vmatpush1.msra.mxu0 0.0
    %428 = vmatprep.subr.mxu0 0.0
    %429 = vmatpush1.msra.mxu0 0.0
    %430 = vmatprep.subr.mxu0 0.0
    %431 = vmatpush1.msra.mxu0 0.0
    %432 = vmatprep.subr.mxu0 0.0
    %433 = vmatpush1.msra.mxu0 0.0
    %434 = vmatprep.subr.mxu0 0.0
    %435 = vmatpush1.msra.mxu0 0.0
    %436 = vmatprep.subr.mxu0 0.0
    %437 = vmatpush1.msra.mxu0 0.0
    %438 = vmatprep.subr.mxu0 0.0
    %439 = vmatpush1.msra.mxu0 0.0
    %440 = vmatprep.subr.mxu0 0.0
    %441 = vmatpush1.msra.mxu0 0.0
    %442 = vmatprep.subr.mxu0 0.0
    %443 = vmatpush1.msra.mxu0 0.0
    %444 = vmatprep.mubr.f32.mxu0 0.0
    %v445 = vand.u32 %v21, 4294901760
    %446 = vmatmul.mubr.f32.gmra.mrb[0].mxu0 %v445
    %v447 = vpop.f32.mrb[0].mxu0
    %v448 = vadd.f32 %v361, %v447
    %v449 = vpop.f32.mrb[0].mxu0
    %v450 = vadd.f32 %v363, %v449
    %451 = vmatprep.mubr.f32.mxu0 0.0
    %v452 = vand.u32 %v24, 4294901760
    %453 = vmatmul.mubr.f32.gmra.mrb[0].mxu0 %v452
    %v454 = vpop.f32.mrb[0].mxu0
    %v455 = vadd.f32 %v370, %v454
    %v456 = vpop.f32.mrb[0].mxu0
    %v457 = vadd.f32 %v372, %v456
    %458 = vdwg.mxu0
    %v459 = vand.u32 %v18, 4294901760
    %460 = vmatprep.subr.mxu0 %v459
    %v461 = vand.u32 %v17, 4294901760
    %462 = vmatpush1.msra.mxu0 %v461
    %463 = vmatprep.subr.mxu0 0.0
    %464 = vmatpush1.msra.mxu0 0.0
    %465 = vmatprep.subr.mxu0 0.0
    %466 = vmatpush1.msra.mxu0 0.0
    %467 = vmatprep.subr.mxu0 0.0
    %468 = vmatpush1.msra.mxu0 0.0
    %469 = vmatprep.subr.mxu0 0.0
    %470 = vmatpush1.msra.mxu0 0.0
    %471 = vmatprep.subr.mxu0 0.0
    %472 = vmatpush1.msra.mxu0 0.0
    %473 = vmatprep.subr.mxu0 0.0
    %474 = vmatpush1.msra.mxu0 0.0
    %475 = vmatprep.subr.mxu0 0.0
    %476 = vmatpush1.msra.mxu0 0.0
    %477 = vmatprep.subr.mxu0 0.0
    %478 = vmatpush1.msra.mxu0 0.0
    %479 = vmatprep.subr.mxu0 0.0
    %480 = vmatpush1.msra.mxu0 0.0
    %481 = vmatprep.subr.mxu0 0.0
    %482 = vmatpush1.msra.mxu0 0.0
    %483 = vmatprep.subr.mxu0 0.0
    %484 = vmatpush1.msra.mxu0 0.0
    %485 = vmatprep.subr.mxu0 0.0
    %486 = vmatpush1.msra.mxu0 0.0
    %487 = vmatprep.subr.mxu0 0.0
    %488 = vmatpush1.msra.mxu0 0.0
    %489 = vmatprep.subr.mxu0 0.0
    %490 = vmatpush1.msra.mxu0 0.0
    %491 = vmatprep.subr.mxu0 0.0
    %492 = vmatpush1.msra.mxu0 0.0
    %493 = vmatprep.subr.mxu0 0.0
    %494 = vmatpush1.msra.mxu0 0.0
    %495 = vmatprep.subr.mxu0 0.0
    %496 = vmatpush1.msra.mxu0 0.0
    %497 = vmatprep.subr.mxu0 0.0
    %498 = vmatpush1.msra.mxu0 0.0
    %499 = vmatprep.subr.mxu0 0.0
    %500 = vmatpush1.msra.mxu0 0.0
    %501 = vmatprep.subr.mxu0 0.0
    %502 = vmatpush1.msra.mxu0 0.0
    %503 = vmatprep.subr.mxu0 0.0
    %504 = vmatpush1.msra.mxu0 0.0
    %505 = vmatprep.subr.mxu0 0.0
    %506 = vmatpush1.msra.mxu0 0.0
    %507 = vmatprep.subr.mxu0 0.0
    %508 = vmatpush1.msra.mxu0 0.0
    %509 = vmatprep.subr.mxu0 0.0
    %510 = vmatpush1.msra.mxu0 0.0
    %511 = vmatprep.subr.mxu0 0.0
    %512 = vmatpush1.msra.mxu0 0.0
    %513 = vmatprep.subr.mxu0 0.0
    %514 = vmatpush1.msra.mxu0 0.0
    %515 = vmatprep.subr.mxu0 0.0
    %516 = vmatpush1.msra.mxu0 0.0
    %517 = vmatprep.subr.mxu0 0.0
    %518 = vmatpush1.msra.mxu0 0.0
    %519 = vmatprep.subr.mxu0 0.0
    %520 = vmatpush1.msra.mxu0 0.0
    %521 = vmatprep.subr.mxu0 0.0
    %522 = vmatpush1.msra.mxu0 0.0
    %523 = vmatprep.subr.mxu0 0.0
    %524 = vmatpush1.msra.mxu0 0.0
    %525 = vmatprep.mubr.f32.mxu0 0.0
    %v526 = vand.u32 %v21, 4294901760
    %527 = vmatmul.mubr.f32.gmra.mrb[0].mxu0 %v526
    %v528 = vpop.f32.mrb[0].mxu0
    %v529 = vadd.f32 %v448, %v528
    %v530 = vpop.f32.mrb[0].mxu0
    %v531 = vadd.f32 %v450, %v530
    %532 = vmatprep.mubr.f32.mxu0 0.0
    %v533 = vand.u32 %v24, 4294901760
    %534 = vmatmul.mubr.f32.gmra.mrb[0].mxu0 %v533
    %v535 = vpop.f32.mrb[0].mxu0
    %v536 = vadd.f32 %v455, %v535
    %v537 = vpop.f32.mrb[0].mxu0
    %v538 = vadd.f32 %v457, %v537
    %539 = vdwg.mxu0
    %v540 = vmul.f32 %v529, 1.442695
    %v541 = vpow.pop %v540
    %v542 = vmul.f32 %v536, 1.442695
    %v543 = vpow.pop %v542
    %v544 = vld [vmem:[%s2] sm:$0x1]
    %v546 = vlaneseq
    %v547 = vshrl.u32 %v546, 7
    %v548 = vsub.s32 0, %v547
    %v549 = vrot.slane %v544, %v548
    %v551 = vsub.f32 %v541, %v549
    %v552 = vsub.f32 %v543, %v549
    %v553 = vmul.f32 %v551, -32.0
    %v554 = vmul.f32 %v552, -32.0
    %v555 = vmul.f32 %v553, %v551
    %v556 = vmul.f32 %v554, %v552
    %v557 = vmul.f32 %v555, 1.442695
    %v558 = vpow.pop %v557
    %v559 = vmul.f32 %v556, 1.442695
    %v560 = vpow.pop %v559
    %v561 = vmul.f32 %v531, %v558
    %v562 = vmul.f32 %v538, %v560
    %563 = vst [vmem:[#allocation2] sm:$0xff] %v561
    %564 = vst [vmem:[#allocation2 + $0x8] sm:$0xff] %v562
    // Predicated region
    $region14: #{tpu_custom_call.1} parent=1 // pred_check
      _
    $region15: #{tpu_custom_call.1} parent=1 // pred_check_branch
      %566 = sbr.rel (0) target = $region17
    $region16: #{tpu_custom_call.1} parent=1 // pred_region
      %s568 = ssub.s32 256, 256
      %569 = vsyncadd [#allocation3], %s568
      %s570 = sshll.u32 [#allocation2], 4
      %s571 = int_to_ptr.vmem [resolvable:$true] %s570
      %576 = dma.vmem_to_hbm [thread:$0]  %s571, 256, %s3, [#allocation3], 128, 128, 8
    $region17: #{tpu_custom_call.1} parent=1 // pred_fallthru
      _
    // Predicated region
    $region18: #{tpu_custom_call.1} parent=1 // pred_check
      _
    $region19: #{tpu_custom_call.1} parent=1 // pred_check_branch
      %578 = sbr.rel (0) target = $region21
    $region20: #{tpu_custom_call.1} parent=1 // pred_region
      %579 = dma.done [#allocation3], 256
    $region21: #{tpu_custom_call.1} parent=1 // pred_fallthru
      _
    %580 = vsyncpa [#allocation3], 1

</llo_original>
